<compile_context>
chip_gen: v7x
topology: tpu7x:2x2x1
jax: 0.10.0
libtpu: 0.0.40
codegen_flags: <defaults>
</compile_context>

<pallas_src>
import functools

import jax
import jax.numpy as jnp
from jax.experimental import pallas as pl
from jax.experimental.pallas import tpu as pltpu

_LANE = 128
_SUBLANE = 8


def _round_up(a, b):
    return (a + b - 1) // b * b


def _tpu_vmem_capacity_bytes():
    """Per-core VMEM capacity; fall back to 128 MiB if the query is unavailable."""
    try:
        return int(pltpu.get_tpu_info().vmem_capacity_bytes)
    except Exception:
        return 128 << 20


def _choose_tile_rows(rows, f_pad, itemsize, target_bytes, min_steps=8):
    """Sublane-aligned row tile ~= target_bytes, with >= min_steps grid steps."""
    tile = max(_SUBLANE, target_bytes // max(1, f_pad * itemsize))
    tile = min(tile, rows)
    # Keep enough grid steps for megacore sharding (v7x) + pipeline depth.
    if rows >= min_steps * _SUBLANE:
        tile = min(tile, max(_SUBLANE, _round_up(pl.cdiv(rows, min_steps), _SUBLANE)))
    if tile >= rows:
        return rows                                   # full dim is always legal
    return max(_SUBLANE, (tile // _SUBLANE) * _SUBLANE)


def _rms_norm_kernel(x_ref, w_ref, o_ref, *, eps, true_feature):
    # x_ref: (TILE_R, F_pad) row block; w_ref: (1, F_pad) resident fp32 weight.
    x32 = x_ref[...].astype(jnp.float32)              # fp32 accumulation
    # Sum of squares over the lane axis, divided by the TRUE feature count so
    # zero-padded lanes (feature % 128 != 0 case) do not bias the mean.
    ss = jnp.sum(x32 * x32, axis=-1, keepdims=True)   # XLU lane reduction
    inv = jax.lax.rsqrt(ss * (1.0 / true_feature) + eps)   # EUP rsqrt
    y = (x32 * inv) * w_ref[...]                      # weight already fp32
    o_ref[...] = y.astype(o_ref.dtype)


def rms_normalization_forward(x, weight, *, eps=1e-6):
    """RMSNorm over the last axis; x: (..., feature), weight: (feature,)."""
    orig_shape = x.shape
    feature = orig_shape[-1]
    assert weight.shape == (feature,)

    rows = 1
    for d in orig_shape[:-1]:
        rows *= d
    x2d = x.reshape(rows, feature)

    # Lane-dense feature axis: pad to a multiple of 128 when needed.
    f_pad = _round_up(feature, _LANE)
    if f_pad != feature:
        # TODO(synk): for very small feature dims a row-packing path (several
        # rows per 128-lane slab + segmented reduction) would avoid the padded
        # HBM traffic; padding keeps the kernel simple and correct here.
        x2d = jnp.pad(x2d, ((0, 0), (0, f_pad - feature)))
    w2d = jnp.pad(weight.astype(jnp.float32), (0, f_pad - feature)).reshape(1, f_pad)

    itemsize = x2d.dtype.itemsize
    vmem_cap = _tpu_vmem_capacity_bytes()
    # v7x (<= 64 MiB VMEM) -> ~4 MiB blocks; v5e/v6e (128 MiB) -> ~8 MiB blocks.
    target_bytes = (4 << 20) if vmem_cap <= (64 << 20) else (8 << 20)
    tile_r = _choose_tile_rows(rows, f_pad, itemsize, target_bytes)
    grid = (pl.cdiv(rows, tile_r),)

    # VMEM budget: double-buffered input + output blocks, fp32 intermediates
    # (x32 and y) for one tile, resident fp32 weight, plus headroom; capped at
    # ~75% of the physical per-core VMEM so it is valid on v7x as well.
    block_bytes = tile_r * f_pad * itemsize
    fp32_tile_bytes = tile_r * f_pad * 4
    vmem_limit = (2 * block_bytes          # double-buffered input
                  + 2 * block_bytes        # double-buffered output
                  + 2 * fp32_tile_bytes    # fp32 intermediates in the body
                  + f_pad * 4              # resident fp32 weight
                  + (2 << 20))             # headroom
    vmem_limit = int(min(max(vmem_limit, 16 << 20), (vmem_cap * 3) // 4))

    out2d = pl.pallas_call(
        functools.partial(_rms_norm_kernel, eps=eps, true_feature=float(feature)),
        out_shape=jax.ShapeDtypeStruct((rows, f_pad), x.dtype),
        grid_spec=pltpu.PrefetchScalarGridSpec(
            num_scalar_prefetch=0,
            grid=grid,
            in_specs=[
                # Large lane-dense row tiles of x; rows are independent.
                pl.BlockSpec((tile_r, f_pad), lambda r: (r, 0)),
                # Constant block index -> weight fetched once, stays in VMEM.
                pl.BlockSpec((1, f_pad), lambda r: (0, 0)),
            ],
            out_specs=pl.BlockSpec((tile_r, f_pad), lambda r: (r, 0)),
        ),
        compiler_params=pltpu.CompilerParams(
            dimension_semantics=("parallel",),   # row tiles split across TCs on v7x
            vmem_limit_bytes=vmem_limit,
        ),
    )(x2d, w2d)

    if f_pad != feature:
        out2d = out2d[:, :feature]
    return out2d.reshape(orig_shape)


if __name__ == "__main__":
    key = jax.random.PRNGKey(0)

    def ref_fn(x, w):
        x32 = x.astype(jnp.float32)
        inv = jax.lax.rsqrt(jnp.mean(x32 * x32, axis=-1, keepdims=True) + 1e-6)
        return (x32 * inv * w.astype(jnp.float32)).astype(x.dtype)

    # Case 1: the module's nominal small shape (batch=2, seq=8, hidden=32)
    #         -> exercises the padded (feature % 128 != 0) path.
    # Case 2: lane-dense path (feature == 128), random weight.
    # Case 3: lane-dense path with a row count that leaves a remainder tile,
    #         exercising masked boundary write-back.
    cases = [
        ((2, 8, 32), "ones"),
        ((2, 8, 128), "rand"),
        ((3, 37, 128), "rand"),
    ]
    for shape, wkind in cases:
        k1, k2, key = jax.random.split(key, 3)
        x = jax.random.normal(k1, shape, dtype=jnp.float32)
        if wkind == "ones":
            w = jnp.ones((shape[-1],), dtype=jnp.float32)   # matches module init
        else:
            w = 1.0 + 0.1 * jax.random.normal(k2, (shape[-1],), dtype=jnp.float32)
        out = jax.block_until_ready(rms_normalization_forward(x, w))
        ref = ref_fn(x, w)
        assert out.shape == x.shape and out.dtype == x.dtype
        assert jnp.allclose(out, ref, atol=1e-5, rtol=1e-5)

    print("KERNEL_OK")
</pallas_src>

<mosaic_0001>
module attributes {stable_mosaic.version = 11 : i64} {
  func.func @_rms_norm_kernel(%arg0: i32, %arg1: memref<16x128xf32, #tpu.memory_space<vmem>>, %arg2: memref<1x128xf32, #tpu.memory_space<vmem>>, %arg3: memref<16x128xf32, #tpu.memory_space<vmem>>) attributes {dimension_semantics = [#tpu.dimension_semantics<parallel>], iteration_bounds = array<i64: 1>, scalar_prefetch = 0 : i64, scratch_operands = 0 : i64, tpu.core_type = #tpu.core_type<tc>, window_params = [{transform_indices = @transform_0, window_bounds = array<i64: 16, 128>}, {pipeline_mode = #tpu.pipeline_mode<synchronous>, transform_indices = @transform_1, window_bounds = array<i64: 1, 128>}, {transform_indices = @transform_2, window_bounds = array<i64: 16, 128>}]} {
    %c0 = arith.constant 0 : index
    %c0_0 = arith.constant 0 : index
    %0 = vector.load %arg1[%c0, %c0_0] : memref<16x128xf32, #tpu.memory_space<vmem>>, vector<16x128xf32>
    %1 = arith.mulf %0, %0 : vector<16x128xf32>
    %cst = arith.constant dense<0.000000e+00> : vector<16xf32>
    %2 = vector.multi_reduction <add>, %1, %cst [1] : vector<16x128xf32> to vector<16xf32>
    %3 = vector.shape_cast %2 : vector<16xf32> to vector<16x1xf32>
    %cst_1 = arith.constant 3.125000e-02 : f32
    %4 = vector.broadcast %cst_1 : f32 to vector<16x1xf32>
    %5 = arith.mulf %3, %4 : vector<16x1xf32>
    %cst_2 = arith.constant 9.99999997E-7 : f32
    %6 = vector.broadcast %cst_2 : f32 to vector<16x1xf32>
    %7 = arith.addf %5, %6 : vector<16x1xf32>
    %8 = math.rsqrt %7 : vector<16x1xf32>
    %9 = vector.broadcast %8 : vector<16x1xf32> to vector<16x128xf32>
    %10 = arith.mulf %0, %9 : vector<16x128xf32>
    %c0_3 = arith.constant 0 : index
    %c0_4 = arith.constant 0 : index
    %11 = vector.load %arg2[%c0_3, %c0_4] : memref<1x128xf32, #tpu.memory_space<vmem>>, vector<1x128xf32>
    %12 = vector.broadcast %11 : vector<1x128xf32> to vector<16x128xf32>
    %13 = arith.mulf %10, %12 : vector<16x128xf32>
    %c0_5 = arith.constant 0 : index
    %c0_6 = arith.constant 0 : index
    %14 = vector.load %arg3[%c0_5, %c0_6] : memref<16x128xf32, #tpu.memory_space<vmem>>, vector<16x128xf32>
    tpu.vector_store %arg3[%c0_5, %c0_6], %13 {strides = array<i32>} : memref<16x128xf32, #tpu.memory_space<vmem>>, vector<16x128xf32>,
    return
  }
  func.func @transform_0(%arg0: i32) -> (i32, i32) {
    %c0_i32 = arith.constant 0 : i32
    %c0_i32_0 = arith.constant 0 : i32
    return %arg0, %c0_i32 : i32, i32
  }
  func.func @transform_1(%arg0: i32) -> (i32, i32) {
    %c0_i32 = arith.constant 0 : i32
    %c0_i32_0 = arith.constant 0 : i32
    %c0_i32_1 = arith.constant 0 : i32
    return %c0_i32, %c0_i32_0 : i32, i32
  }
  func.func @transform_2(%arg0: i32) -> (i32, i32) {
    %c0_i32 = arith.constant 0 : i32
    %c0_i32_0 = arith.constant 0 : i32
    return %arg0, %c0_i32 : i32, i32
  }
}

</mosaic_0001>

<llo_original>
// kernel: tpu_custom_call.1
$region0: #{tpu_custom_call.1}
  #allocation0 [shape = 'u32[]', space=smem, size = 0x4, offset = 0x4, fixed_abs, tag = 'smem constant byte address 0x4 - core index']
  #allocation1 [shape = 'u32[144,128]{1,0:T(1,128)}', space=vmem, size = 0x12000, scoped, tag = 'internal scratch']
  %s0 = inlined_call_operand.hbm [shape: f32[16,128], index: 0, kind: input, shape index: {}]
  %s1 = inlined_call_operand.vmem [shape: f32[1,128], index: 1, kind: input, shape index: {}]
  %s2 = inlined_call_operand.hbm [shape: f32[16,128], index: 2, kind: output, shape index: {}]
  %s3 = sld [smem:[#allocation0]]
  $region22: #{tpu_custom_call.1} parent=0
    _
  %s5 = ssub.s32 1, %s3
  %s6 = scalar_select 0, %s5, %s3
  $region1: #{tpu_custom_call.1} parent=0
    #allocation2 [shape = 'u8[8192]{0}', space=vmem, size = 0x2000, scoped, tag = 'input window, operand 0, single buffered']
    #allocation3 [shape = 's32[1]{0}', space=sflag, size = 0x4, scoped, tag = 'scoped memory for tpu_custom_call.1']
    #allocation4 [shape = 's32[1]{0}', space=sflag, size = 0x4, scoped, tag = 'scoped memory for tpu_custom_call.1']
    #allocation5 [shape = 'u8[8192]{0}', space=vmem, size = 0x2000, scoped, tag = 'output window, operand 0, single buffered']
    %7 = vsyncpa [#allocation3], 0
    %8 = vsyncpa [#allocation4], 0
    // Predicated region
    $region2: #{tpu_custom_call.1} parent=1 // pred_check
      _
    $region3: #{tpu_custom_call.1} parent=1 // pred_check_branch
      %10 = sbr.rel (0) target = $region5
    $region4: #{tpu_custom_call.1} parent=1 // pred_region
      %s12 = ssub.s32 256, 256
      %13 = vsyncadd [#allocation3], %s12
      %s14 = sshll.u32 [#allocation2], 4
      %s15 = int_to_ptr.vmem [resolvable:$true] %s14
      %20 = dma.hbm_to_vmem [thread:$0]  %s0, 256, %s15, [#allocation3], 128, 128, 8
    $region5: #{tpu_custom_call.1} parent=1 // pred_fallthru
      _
    // Predicated region
    $region6: #{tpu_custom_call.1} parent=1 // pred_check
      _
    $region7: #{tpu_custom_call.1} parent=1 // pred_check_branch
      %22 = sbr.rel (0) target = $region9
    $region8: #{tpu_custom_call.1} parent=1 // pred_region
      _
    $region9: #{tpu_custom_call.1} parent=1 // pred_fallthru
      _
    // Predicated region
    $region10: #{tpu_custom_call.1} parent=1 // pred_check
      _
    $region11: #{tpu_custom_call.1} parent=1 // pred_check_branch
      %24 = sbr.rel (0) target = $region13
    $region12: #{tpu_custom_call.1} parent=1 // pred_region
      %25 = dma.done [#allocation3], 256
    $region13: #{tpu_custom_call.1} parent=1 // pred_fallthru
      _
    %v26 = vld [vmem:[#allocation2] sm:$0xff]
    %v27 = vld [vmem:[#allocation2 + $0x8] sm:$0xff]
    %v28 = vmul.f32 %v26, %v26
    %v29 = vmul.f32 %v27, %v27
    %30 = vadd.xlane.f32.xlu0 %v28
    %v31 = vpop.xlane.xlu0 %30
    %32 = vadd.xlane.f32.xlu0 %v29
    %v33 = vpop.xlane.xlu0 %32
    %v34 = vmul.f32 %v31, 0.03125
    %v35 = vmul.f32 %v33, 0.03125
    %v36 = vadd.f32 %v34, 1e-06
    %v37 = vadd.f32 %v35, 1e-06
    %v38 = vrsqrt.pop %v36
    %v39 = vrsqrt.pop %v37
    %v40 = vmul.f32 %v26, %v38
    %v41 = vmul.f32 %v27, %v39
    %v42 = vld [vmem:[%s1] sm:$0x1]
    %v44 = vlaneseq
    %v45 = vshrl.u32 %v44, 7
    %v46 = vsub.s32 0, %v45
    %v47 = vrot.slane %v42, %v46
    %v49 = vmul.f32 %v40, %v47
    %v50 = vmul.f32 %v41, %v47
    %51 = vst [vmem:[#allocation5] sm:$0xff] %v49
    %52 = vst [vmem:[#allocation5 + $0x8] sm:$0xff] %v50
    // Predicated region
    $region14: #{tpu_custom_call.1} parent=1 // pred_check
      _
    $region15: #{tpu_custom_call.1} parent=1 // pred_check_branch
      %54 = sbr.rel (0) target = $region17
    $region16: #{tpu_custom_call.1} parent=1 // pred_region
      %s56 = ssub.s32 256, 256
      %57 = vsyncadd [#allocation4], %s56
      %s58 = sshll.u32 [#allocation5], 4
      %s59 = int_to_ptr.vmem [resolvable:$true] %s58
      %64 = dma.vmem_to_hbm [thread:$0]  %s59, 256, %s2, [#allocation4], 128, 128, 8
    $region17: #{tpu_custom_call.1} parent=1 // pred_fallthru
      _
    // Predicated region
    $region18: #{tpu_custom_call.1} parent=1 // pred_check
      _
    $region19: #{tpu_custom_call.1} parent=1 // pred_check_branch
      %66 = sbr.rel (0) target = $region21
    $region20: #{tpu_custom_call.1} parent=1 // pred_region
      %67 = dma.done [#allocation4], 256
    $region21: #{tpu_custom_call.1} parent=1 // pred_fallthru
      _
    %68 = vsyncpa [#allocation3], 1
    %69 = vsyncpa [#allocation4], 1

</llo_original>
